<compile_context>
chip_gen: v7x
topology: tpu7x:2x2x1
jax: 0.10.0
libtpu: 0.0.40
codegen_flags: <defaults>
</compile_context>

<pallas_src>
import jax
import jax.numpy as jnp
from jax.experimental import pallas as pl
from jax.experimental.pallas import tpu as pltpu


def decoder_kernel(enc_ref, w_ref, out_ref):
    # enc_ref: [tm, E], w_ref: [E, N], out_ref: [tm, N]
    # K (= E) is tiny, so a VPU broadcast multiply-add chain beats the MXU.
    enc = enc_ref[...]
    w = w_ref[...]
    e = enc_ref.shape[1]
    acc = enc[:, 0:1] * w[0:1, :]
    for k in range(1, e):            # unrolled at trace time (E is static & small)
        acc = acc + enc[:, k:k + 1] * w[k:k + 1, :]
    out_ref[...] = acc.astype(out_ref.dtype)


def decoder_forward(encoded, weight, *, block_b=2048):
    """Pallas forward for Decoder.

    encoded: [B, end_members] f32
    weight:  [num_bands, end_members] f32 (PyTorch nn.Linear layout)
    returns: [B, num_bands] f32
    """
    B, E = encoded.shape
    N = weight.shape[0]

    # Weight as [end_members, num_bands]; kept at its true width (no lane pad).
    w_t = weight.T

    # Batch tile: multiple of 8 sublanes (or the full batch if tiny), capped at
    # block_b.  Any ragged last block is handled by Pallas with masked writes,
    # so no batch padding / output slicing is needed.
    if B <= 8:
        tm = B
    else:
        tm = min(block_b, (B // 8) * 8)
    grid = (pl.cdiv(B, tm),)

    cost = pl.CostEstimate(
        flops=2 * B * E * N,
        transcendentals=0,
        bytes_accessed=4 * (B * E + E * N + B * N),
    )

    out = pl.pallas_call(
        decoder_kernel,
        out_shape=jax.ShapeDtypeStruct((B, N), jnp.float32),
        grid=grid,
        in_specs=[
            pl.BlockSpec((tm, E), lambda i: (i, 0)),   # batch tile of activations
            pl.BlockSpec((E, N), lambda i: (0, 0)),    # full weight, resident
        ],
        out_specs=pl.BlockSpec((tm, N), lambda i: (i, 0)),
        compiler_params=pltpu.CompilerParams(
            dimension_semantics=("parallel",)),
        cost_estimate=cost,
    )(encoded, w_t)

    return out


def reference_forward(encoded, weight):
    """Pure-JAX reference matching the PyTorch module."""
    return encoded @ weight.T


if __name__ == "__main__":
    num_bands = 156
    end_members = 3
    B = 8

    key = jax.random.PRNGKey(0)
    k_w, k_e = jax.random.split(key)

    # PyTorch-style uniform(+-1/sqrt(fan_in)) init, torch layout [out, in].
    bound = 1.0 / jnp.sqrt(jnp.float32(end_members))
    weight = jax.random.uniform(
        k_w, (num_bands, end_members), jnp.float32, -bound, bound)
    encoded = jax.random.normal(k_e, (B, end_members), jnp.float32)

    decoded = decoder_forward(encoded, weight)
    decoded = jax.block_until_ready(decoded)

    ref = reference_forward(encoded, weight)
    assert decoded.shape == (B, num_bands)
    assert jnp.allclose(decoded, ref, atol=1e-5, rtol=1e-5)

    print("KERNEL_OK")
</pallas_src>

<mosaic_0001>
module attributes {stable_mosaic.version = 11 : i64} {
  func.func @decoder_kernel(%arg0: i32, %arg1: memref<8x3xf32, #tpu.memory_space<vmem>>, %arg2: memref<3x156xf32, #tpu.memory_space<vmem>>, %arg3: memref<8x156xf32, #tpu.memory_space<vmem>>) attributes {dimension_semantics = [#tpu.dimension_semantics<parallel>], iteration_bounds = array<i64: 1>, scalar_prefetch = 0 : i64, scratch_operands = 0 : i64, tpu.core_type = #tpu.core_type<tc>, window_params = [{transform_indices = @transform_0, window_bounds = array<i64: 8, 3>}, {pipeline_mode = #tpu.pipeline_mode<synchronous>, transform_indices = @transform_1, window_bounds = array<i64: 3, 156>}, {transform_indices = @transform_2, window_bounds = array<i64: 8, 156>}]} {
    %c0 = arith.constant 0 : index
    %c0_0 = arith.constant 0 : index
    %0 = vector.load %arg1[%c0, %c0_0] : memref<8x3xf32, #tpu.memory_space<vmem>>, vector<8x3xf32>
    %c0_1 = arith.constant 0 : index
    %c0_2 = arith.constant 0 : index
    %1 = vector.load %arg2[%c0_1, %c0_2] : memref<3x156xf32, #tpu.memory_space<vmem>>, vector<3x156xf32>
    %2 = vector.extract_strided_slice %0 {offsets = [0, 0], sizes = [8, 1], strides = [1, 1]} : vector<8x3xf32> to vector<8x1xf32>
    %3 = vector.extract_strided_slice %1 {offsets = [0, 0], sizes = [1, 156], strides = [1, 1]} : vector<3x156xf32> to vector<1x156xf32>
    %4 = vector.broadcast %2 : vector<8x1xf32> to vector<8x156xf32>
    %5 = vector.broadcast %3 : vector<1x156xf32> to vector<8x156xf32>
    %6 = arith.mulf %4, %5 : vector<8x156xf32>
    %7 = vector.extract_strided_slice %0 {offsets = [0, 1], sizes = [8, 1], strides = [1, 1]} : vector<8x3xf32> to vector<8x1xf32>
    %8 = vector.extract_strided_slice %1 {offsets = [1, 0], sizes = [1, 156], strides = [1, 1]} : vector<3x156xf32> to vector<1x156xf32>
    %9 = vector.broadcast %7 : vector<8x1xf32> to vector<8x156xf32>
    %10 = vector.broadcast %8 : vector<1x156xf32> to vector<8x156xf32>
    %11 = arith.mulf %9, %10 : vector<8x156xf32>
    %12 = arith.addf %6, %11 : vector<8x156xf32>
    %13 = vector.extract_strided_slice %0 {offsets = [0, 2], sizes = [8, 1], strides = [1, 1]} : vector<8x3xf32> to vector<8x1xf32>
    %14 = vector.extract_strided_slice %1 {offsets = [2, 0], sizes = [1, 156], strides = [1, 1]} : vector<3x156xf32> to vector<1x156xf32>
    %15 = vector.broadcast %13 : vector<8x1xf32> to vector<8x156xf32>
    %16 = vector.broadcast %14 : vector<1x156xf32> to vector<8x156xf32>
    %17 = arith.mulf %15, %16 : vector<8x156xf32>
    %18 = arith.addf %12, %17 : vector<8x156xf32>
    %c0_3 = arith.constant 0 : index
    %c0_4 = arith.constant 0 : index
    %19 = vector.load %arg3[%c0_3, %c0_4] : memref<8x156xf32, #tpu.memory_space<vmem>>, vector<8x156xf32>
    tpu.vector_store %arg3[%c0_3, %c0_4], %18 {strides = array<i32>} : memref<8x156xf32, #tpu.memory_space<vmem>>, vector<8x156xf32>,
    return
  }
  func.func @transform_0(%arg0: i32) -> (i32, i32) {
    %c0_i32 = arith.constant 0 : i32
    %c0_i32_0 = arith.constant 0 : i32
    return %arg0, %c0_i32 : i32, i32
  }
  func.func @transform_1(%arg0: i32) -> (i32, i32) {
    %c0_i32 = arith.constant 0 : i32
    %c0_i32_0 = arith.constant 0 : i32
    %c0_i32_1 = arith.constant 0 : i32
    return %c0_i32, %c0_i32_0 : i32, i32
  }
  func.func @transform_2(%arg0: i32) -> (i32, i32) {
    %c0_i32 = arith.constant 0 : i32
    %c0_i32_0 = arith.constant 0 : i32
    return %arg0, %c0_i32 : i32, i32
  }
}

</mosaic_0001>

<llo_original>
// kernel: tpu_custom_call.1
$region0: #{tpu_custom_call.1}
  #allocation0 [shape = 'u32[]', space=smem, size = 0x4, offset = 0x4, fixed_abs, tag = 'smem constant byte address 0x4 - core index']
  #allocation1 [shape = 'u32[144,128]{1,0:T(1,128)}', space=vmem, size = 0x12000, scoped, tag = 'internal scratch']
  %s0 = inlined_call_operand.vmem [shape: f32[8,3], index: 0, kind: input, shape index: {}]
  %s1 = inlined_call_operand.vmem [shape: f32[3,156], index: 1, kind: input, shape index: {}]
  %s2 = inlined_call_operand.hbm [shape: f32[8,156], index: 2, kind: output, shape index: {}]
  %s3 = sld [smem:[#allocation0]]
  $region18: #{tpu_custom_call.1} parent=0
    _
  %s5 = ssub.s32 1, %s3
  %s6 = scalar_select 0, %s5, %s3
  $region1: #{tpu_custom_call.1} parent=0
    #allocation2 [shape = 'u8[8192]{0}', space=vmem, size = 0x2000, scoped, tag = 'output window, operand 0, single buffered']
    #allocation3 [shape = 's32[1]{0}', space=sflag, size = 0x4, scoped, tag = 'scoped memory for tpu_custom_call.1']
    %7 = vsyncpa [#allocation3], 0
    // Predicated region
    $region2: #{tpu_custom_call.1} parent=1 // pred_check
      _
    $region3: #{tpu_custom_call.1} parent=1 // pred_check_branch
      %9 = sbr.rel (0) target = $region5
    $region4: #{tpu_custom_call.1} parent=1 // pred_region
      _
    $region5: #{tpu_custom_call.1} parent=1 // pred_fallthru
      _
    // Predicated region
    $region6: #{tpu_custom_call.1} parent=1 // pred_check
      _
    $region7: #{tpu_custom_call.1} parent=1 // pred_check_branch
      %11 = sbr.rel (0) target = $region9
    $region8: #{tpu_custom_call.1} parent=1 // pred_region
      _
    $region9: #{tpu_custom_call.1} parent=1 // pred_fallthru
      _
    %v12 = vld [vmem:[%s0] sm:$0xff]
    %v13 = vld [vmem:[%s1] sm:$0x77]
    %15 = vset.pattern.permute.xlu0 0
    %16 = vperm.xlu0 %15, %v12
    %v17 = vpop.permute.xlu0 %16
    %v20 = vlaneseq
    %v21 = vshrl.u32 %v20, 7
    %v22 = vsub.s32 0, %v21
    %v23 = vrot.slane %v13, %v22
    %v24 = vlaneseq
    %v25 = vshrl.u32 %v24, 7
    %v26 = vsub.s32 4, %v25
    %v27 = vrot.slane %v13, %v26
    %v30 = vlaneseq
    %v31 = vshrl.u32 %v30, 7
    %v32 = vsub.s32 0, %v31
    %v33 = vrot.slane %v23, %v32
    %v34 = vlaneseq
    %v35 = vshrl.u32 %v34, 7
    %v36 = vsub.s32 0, %v35
    %v37 = vrot.slane %v27, %v36
    %v38 = vmul.f32 %v17, %v33
    %v39 = vmul.f32 %v17, %v37
    %40 = vset.pattern.permute.xlu0 1
    %41 = vperm.xlu0 %40, %v12
    %v42 = vpop.permute.xlu0 %41
    %v44 = vlaneseq
    %v45 = vshrl.u32 %v44, 7
    %v46 = vsub.s32 1, %v45
    %v47 = vrot.slane %v13, %v46
    %v48 = vlaneseq
    %v49 = vshrl.u32 %v48, 7
    %v50 = vsub.s32 5, %v49
    %v51 = vrot.slane %v13, %v50
    %v54 = vlaneseq
    %v55 = vshrl.u32 %v54, 7
    %v56 = vsub.s32 1, %v55
    %v57 = vrot.slane %v47, %v56
    %v58 = vlaneseq
    %v59 = vshrl.u32 %v58, 7
    %v60 = vsub.s32 1, %v59
    %v61 = vrot.slane %v51, %v60
    %v62 = vmul.f32 %v42, %v57
    %v63 = vmul.f32 %v42, %v61
    %v64 = vadd.f32 %v38, %v62
    %v65 = vadd.f32 %v39, %v63
    %66 = vset.pattern.permute.xlu0 2
    %67 = vperm.xlu0 %66, %v12
    %v68 = vpop.permute.xlu0 %67
    %v70 = vlaneseq
    %v71 = vshrl.u32 %v70, 7
    %v72 = vsub.s32 2, %v71
    %v73 = vrot.slane %v13, %v72
    %v74 = vlaneseq
    %v75 = vshrl.u32 %v74, 7
    %v76 = vsub.s32 6, %v75
    %v77 = vrot.slane %v13, %v76
    %v80 = vlaneseq
    %v81 = vshrl.u32 %v80, 7
    %v82 = vsub.s32 2, %v81
    %v83 = vrot.slane %v73, %v82
    %v84 = vlaneseq
    %v85 = vshrl.u32 %v84, 7
    %v86 = vsub.s32 2, %v85
    %v87 = vrot.slane %v77, %v86
    %v88 = vmul.f32 %v68, %v83
    %v89 = vmul.f32 %v68, %v87
    %v90 = vadd.f32 %v64, %v88
    %v91 = vadd.f32 %v65, %v89
    %92 = vst [vmem:[#allocation2] sm:$0xff] %v90
    %vm93 = vcmask 228352
    %94 = vst.msk [vmem:[#allocation2 + $0x8] sm:$0xff] %vm93, %v91
    // Predicated region
    $region10: #{tpu_custom_call.1} parent=1 // pred_check
      _
    $region11: #{tpu_custom_call.1} parent=1 // pred_check_branch
      %96 = sbr.rel (0) target = $region13
    $region12: #{tpu_custom_call.1} parent=1 // pred_region
      %s98 = ssub.s32 256, 256
      %99 = vsyncadd [#allocation3], %s98
      %s101 = sshll.u32 [#allocation2], 4
      %s102 = int_to_ptr.vmem [resolvable:$true] %s101
      %104 = dma.vmem_to_hbm [thread:$0]  %s102, 256, %s2, [#allocation3]
    $region13: #{tpu_custom_call.1} parent=1 // pred_fallthru
      _
    // Predicated region
    $region14: #{tpu_custom_call.1} parent=1 // pred_check
      _
    $region15: #{tpu_custom_call.1} parent=1 // pred_check_branch
      %106 = sbr.rel (0) target = $region17
    $region16: #{tpu_custom_call.1} parent=1 // pred_region
      %107 = dma.done [#allocation3], 256
    $region17: #{tpu_custom_call.1} parent=1 // pred_fallthru
      _
    %108 = vsyncpa [#allocation3], 1

</llo_original>
